<compile_context>
chip_gen: v7x
topology: tpu7x:2x2x1
jax: 0.10.0
libtpu: 0.0.40
codegen_flags: <defaults>
</compile_context>

<pallas_src>
import jax
import jax.numpy as jnp
from jax.experimental import pallas as pl
from jax.experimental.pallas import tpu as pltpu

_TARGET_BLOCK_BYTES = 4 * 1024 * 1024  # ~4 MiB f32 block (near HBM roofline)


def _perturb_clamp_kernel(x_ref, p_ref, o_ref):
    # elementwise: out = clamp(x + perturb, 0, 1)  (VPU; kernel is HBM-bound)
    o_ref[...] = jnp.clip(x_ref[...] + p_ref[...], 0.0, 1.0)


def _round_up(a, b):
    return ((a + b - 1) // b) * b


def _choose_tile_rows(n, f, itemsize):
    # Largest multiple-of-8 row count whose block is <= ~4 MiB, but no larger
    # than the (sublane-rounded) full row extent.
    rows = max(8, (_TARGET_BLOCK_BYTES // max(1, f * itemsize)) // 8 * 8)
    rows = min(rows, _round_up(n, 8))
    return rows


@jax.jit
def _perturb_clamp(x, perturb):
    n, f = x.shape
    itemsize = x.dtype.itemsize
    tile_rows = _choose_tile_rows(n, f, itemsize)
    grid = (pl.cdiv(n, tile_rows),)

    # Block last dim == full F (allowed by the (8,128)-or-full-dim rule);
    # second-to-last dim is a multiple of 8; Pallas masks the boundary block.
    spec = pl.BlockSpec((tile_rows, f), lambda i: (i, 0))

    block_bytes = tile_rows * f * itemsize
    # (2 inputs + 1 output) x 2 buffers x block_bytes plus headroom; capped so
    # it stays within v7x's 64 MiB physical VMEM.
    vmem_limit = int(min(64 * 1024 * 1024,
                         max(32 * 1024 * 1024, 8 * block_bytes)))

    return pl.pallas_call(
        _perturb_clamp_kernel,
        out_shape=jax.ShapeDtypeStruct((n, f), x.dtype),
        grid_spec=pltpu.PrefetchScalarGridSpec(
            num_scalar_prefetch=0,
            grid=grid,
            in_specs=[spec, spec],
            out_specs=spec,
        ),
        compiler_params=pltpu.CompilerParams(
            dimension_semantics=("parallel",),
            vmem_limit_bytes=vmem_limit,
        ),
    )(x, perturb)


def adversarial_attack_forward(x, perturb, edge_index=None):
    """Pallas forward for AdversarialAttack.

    x:        [N, F] float32 node features
    perturb:  [N, F] float32 learned perturbation parameter
    edge_index: unused here (consumed only by the external wrapped model).
    Returns clamp(x + perturb, 0, 1) with shape [N, F].
    """
    del edge_index  # consumed only by the external wrapped model
    assert perturb.shape == x.shape
    return _perturb_clamp(x, perturb)


if __name__ == "__main__":
    key = jax.random.PRNGKey(0)
    epsilon = 0.01

    # Small shapes consistent with the module (real Cora is 2708 x 1433):
    #  - (256, 160): "nice" multiple-of-8 row count
    #  - (123, 157): ragged rows/cols exercising the masked boundary block
    for (num_nodes, num_features) in [(256, 160), (123, 157)]:
        k_x, k_p, k_e, key = jax.random.split(key, 4)

        # deterministic "input features" in [0, 1]
        x = jax.random.uniform(k_x, (num_nodes, num_features), dtype=jnp.float32)

        # deterministic parameter init: nn.init.uniform_(perturb, -eps, eps)
        perturb = jax.random.uniform(
            k_p, (num_nodes, num_features), dtype=jnp.float32,
            minval=-epsilon, maxval=epsilon,
        )

        # dummy edge_index (2, E) — only consumed by the external wrapped model
        edge_index = jax.random.randint(k_e, (2, 8), 0, num_nodes, dtype=jnp.int32)

        out = adversarial_attack_forward(x, perturb, edge_index)
        out = jax.block_until_ready(out)

        # reference check in plain JAX
        ref = jnp.clip(x + perturb, 0.0, 1.0)
        assert out.shape == (num_nodes, num_features)
        assert jnp.allclose(out, ref, atol=1e-6), "mismatch vs reference"

    print("KERNEL_OK")
</pallas_src>

<mosaic_0001>
module attributes {stable_mosaic.version = 11 : i64} {
  func.func @_perturb_clamp_kernel(%arg0: i32, %arg1: memref<256x160xf32, #tpu.memory_space<vmem>>, %arg2: memref<256x160xf32, #tpu.memory_space<vmem>>, %arg3: memref<256x160xf32, #tpu.memory_space<vmem>>) attributes {dimension_semantics = [#tpu.dimension_semantics<parallel>], iteration_bounds = array<i64: 1>, scalar_prefetch = 0 : i64, scratch_operands = 0 : i64, tpu.core_type = #tpu.core_type<tc>, window_params = [{transform_indices = @transform_0, window_bounds = array<i64: 256, 160>}, {transform_indices = @transform_1, window_bounds = array<i64: 256, 160>}, {transform_indices = @transform_2, window_bounds = array<i64: 256, 160>}]} {
    %c0 = arith.constant 0 : index
    %c0_0 = arith.constant 0 : index
    %0 = vector.load %arg1[%c0, %c0_0] : memref<256x160xf32, #tpu.memory_space<vmem>>, vector<256x160xf32>
    %c0_1 = arith.constant 0 : index
    %c0_2 = arith.constant 0 : index
    %1 = vector.load %arg2[%c0_1, %c0_2] : memref<256x160xf32, #tpu.memory_space<vmem>>, vector<256x160xf32>
    %2 = arith.addf %0, %1 : vector<256x160xf32>
    %cst = arith.constant 0.000000e+00 : f32
    %cst_3 = arith.constant 1.000000e+00 : f32
    %3 = vector.broadcast %cst : f32 to vector<256x160xf32>
    %4 = arith.maximumf %3, %2 : vector<256x160xf32>
    %5 = vector.broadcast %cst_3 : f32 to vector<256x160xf32>
    %6 = arith.minimumf %5, %4 : vector<256x160xf32>
    %c0_4 = arith.constant 0 : index
    %c0_5 = arith.constant 0 : index
    %7 = vector.load %arg3[%c0_4, %c0_5] : memref<256x160xf32, #tpu.memory_space<vmem>>, vector<256x160xf32>
    tpu.vector_store %arg3[%c0_4, %c0_5], %6 {strides = array<i32>} : memref<256x160xf32, #tpu.memory_space<vmem>>, vector<256x160xf32>,
    return
  }
  func.func @transform_0(%arg0: i32) -> (i32, i32) {
    %c0_i32 = arith.constant 0 : i32
    %c0_i32_0 = arith.constant 0 : i32
    return %arg0, %c0_i32 : i32, i32
  }
  func.func @transform_1(%arg0: i32) -> (i32, i32) {
    %c0_i32 = arith.constant 0 : i32
    %c0_i32_0 = arith.constant 0 : i32
    return %arg0, %c0_i32 : i32, i32
  }
  func.func @transform_2(%arg0: i32) -> (i32, i32) {
    %c0_i32 = arith.constant 0 : i32
    %c0_i32_0 = arith.constant 0 : i32
    return %arg0, %c0_i32 : i32, i32
  }
}

</mosaic_0001>

<llo_original>
// kernel: _perturb_clamp.1
$region0: #{_perturb_clamp.1}
  #allocation0 [shape = 'u32[]', space=smem, size = 0x4, offset = 0x4, fixed_abs, tag = 'smem constant byte address 0x4 - core index']
  #allocation1 [shape = 'u32[144,128]{1,0:T(1,128)}', space=vmem, size = 0x12000, scoped, tag = 'internal scratch']
  %s0 = inlined_call_operand.vmem [shape: f32[256,160], index: 0, kind: input, shape index: {}]
  %s1 = inlined_call_operand.vmem [shape: f32[256,160], index: 1, kind: input, shape index: {}]
  %s2 = inlined_call_operand.vmem [shape: f32[256,160], index: 2, kind: output, shape index: {}]
  %s3 = sld [smem:[#allocation0]]
  $region18: #{_perturb_clamp.1} parent=0
    _
  %s5 = ssub.s32 1, %s3
  %s6 = scalar_select 0, %s5, %s3
  // Predicated region
  $region2: #{_perturb_clamp.1} parent=0 // pred_check
    _
  $region3: #{_perturb_clamp.1} parent=0 // pred_check_branch
    %8 = sbr.rel (0) target = $region5
  $region4: #{_perturb_clamp.1} parent=0 // pred_region
    _
  $region5: #{_perturb_clamp.1} parent=0 // pred_fallthru
    _
  // Predicated region
  $region6: #{_perturb_clamp.1} parent=0 // pred_check
    _
  $region7: #{_perturb_clamp.1} parent=0 // pred_check_branch
    %10 = sbr.rel (0) target = $region9
  $region8: #{_perturb_clamp.1} parent=0 // pred_region
    _
  $region9: #{_perturb_clamp.1} parent=0 // pred_fallthru
    _
  %v11 = vld [vmem:[%s0] sm:$0xff]
  %v12 = vld [vmem:[%s0 + $0x8] sm:$0xff]
  %v13 = vld [vmem:[%s0 + $0x10] sm:$0xff]
  %v14 = vld [vmem:[%s0 + $0x18] sm:$0xff]
  %v15 = vld [vmem:[%s0 + $0x20] sm:$0xff]
  %v16 = vld [vmem:[%s0 + $0x28] sm:$0xff]
  %v17 = vld [vmem:[%s0 + $0x30] sm:$0xff]
  %v18 = vld [vmem:[%s0 + $0x38] sm:$0xff]
  %v19 = vld [vmem:[%s0 + $0x40] sm:$0xff]
  %v20 = vld [vmem:[%s0 + $0x48] sm:$0xff]
  %v21 = vld [vmem:[%s0 + $0x50] sm:$0xff]
  %v22 = vld [vmem:[%s0 + $0x58] sm:$0xff]
  %v23 = vld [vmem:[%s0 + $0x60] sm:$0xff]
  %v24 = vld [vmem:[%s0 + $0x68] sm:$0xff]
  %v25 = vld [vmem:[%s0 + $0x70] sm:$0xff]
  %v26 = vld [vmem:[%s0 + $0x78] sm:$0xff]
  %v27 = vld [vmem:[%s0 + $0x80] sm:$0xff]
  %v28 = vld [vmem:[%s0 + $0x88] sm:$0xff]
  %v29 = vld [vmem:[%s0 + $0x90] sm:$0xff]
  %v30 = vld [vmem:[%s0 + $0x98] sm:$0xff]
  %v31 = vld [vmem:[%s0 + $0xa0] sm:$0xff]
  %v32 = vld [vmem:[%s0 + $0xa8] sm:$0xff]
  %v33 = vld [vmem:[%s0 + $0xb0] sm:$0xff]
  %v34 = vld [vmem:[%s0 + $0xb8] sm:$0xff]
  %v35 = vld [vmem:[%s0 + $0xc0] sm:$0xff]
  %v36 = vld [vmem:[%s0 + $0xc8] sm:$0xff]
  %v37 = vld [vmem:[%s0 + $0xd0] sm:$0xff]
  %v38 = vld [vmem:[%s0 + $0xd8] sm:$0xff]
  %v39 = vld [vmem:[%s0 + $0xe0] sm:$0xff]
  %v40 = vld [vmem:[%s0 + $0xe8] sm:$0xff]
  %v41 = vld [vmem:[%s0 + $0xf0] sm:$0xff]
  %v42 = vld [vmem:[%s0 + $0xf8] sm:$0xff]
  %v43 = vld [vmem:[%s0 + $0x100] sm:$0xff]
  %v44 = vld [vmem:[%s0 + $0x108] sm:$0xff]
  %v45 = vld [vmem:[%s0 + $0x110] sm:$0xff]
  %v46 = vld [vmem:[%s0 + $0x118] sm:$0xff]
  %v47 = vld [vmem:[%s0 + $0x120] sm:$0xff]
  %v48 = vld [vmem:[%s0 + $0x128] sm:$0xff]
  %v49 = vld [vmem:[%s0 + $0x130] sm:$0xff]
  %v50 = vld [vmem:[%s0 + $0x138] sm:$0xff]
  %v51 = vld [vmem:[%s0 + $0x140] sm:$0xff]
  %v52 = vld [vmem:[%s0 + $0x148] sm:$0xff]
  %v53 = vld [vmem:[%s0 + $0x150] sm:$0xff]
  %v54 = vld [vmem:[%s0 + $0x158] sm:$0xff]
  %v55 = vld [vmem:[%s0 + $0x160] sm:$0xff]
  %v56 = vld [vmem:[%s0 + $0x168] sm:$0xff]
  %v57 = vld [vmem:[%s0 + $0x170] sm:$0xff]
  %v58 = vld [vmem:[%s0 + $0x178] sm:$0xff]
  %v59 = vld [vmem:[%s0 + $0x180] sm:$0xff]
  %v60 = vld [vmem:[%s0 + $0x188] sm:$0xff]
  %v61 = vld [vmem:[%s0 + $0x190] sm:$0xff]
  %v62 = vld [vmem:[%s0 + $0x198] sm:$0xff]
  %v63 = vld [vmem:[%s0 + $0x1a0] sm:$0xff]
  %v64 = vld [vmem:[%s0 + $0x1a8] sm:$0xff]
  %v65 = vld [vmem:[%s0 + $0x1b0] sm:$0xff]
  %v66 = vld [vmem:[%s0 + $0x1b8] sm:$0xff]
  %v67 = vld [vmem:[%s0 + $0x1c0] sm:$0xff]
  %v68 = vld [vmem:[%s0 + $0x1c8] sm:$0xff]
  %v69 = vld [vmem:[%s0 + $0x1d0] sm:$0xff]
  %v70 = vld [vmem:[%s0 + $0x1d8] sm:$0xff]
  %v71 = vld [vmem:[%s0 + $0x1e0] sm:$0xff]
  %v72 = vld [vmem:[%s0 + $0x1e8] sm:$0xff]
  %v73 = vld [vmem:[%s0 + $0x1f0] sm:$0xff]
  %v74 = vld [vmem:[%s0 + $0x1f8] sm:$0xff]
  %v75 = vld [vmem:[%s1] sm:$0xff]
  %v76 = vld [vmem:[%s1 + $0x8] sm:$0xff]
  %v77 = vld [vmem:[%s1 + $0x10] sm:$0xff]
  %v78 = vld [vmem:[%s1 + $0x18] sm:$0xff]
  %v79 = vld [vmem:[%s1 + $0x20] sm:$0xff]
  %v80 = vld [vmem:[%s1 + $0x28] sm:$0xff]
  %v81 = vld [vmem:[%s1 + $0x30] sm:$0xff]
  %v82 = vld [vmem:[%s1 + $0x38] sm:$0xff]
  %v83 = vld [vmem:[%s1 + $0x40] sm:$0xff]
  %v84 = vld [vmem:[%s1 + $0x48] sm:$0xff]
  %v85 = vld [vmem:[%s1 + $0x50] sm:$0xff]
  %v86 = vld [vmem:[%s1 + $0x58] sm:$0xff]
  %v87 = vld [vmem:[%s1 + $0x60] sm:$0xff]
  %v88 = vld [vmem:[%s1 + $0x68] sm:$0xff]
  %v89 = vld [vmem:[%s1 + $0x70] sm:$0xff]
  %v90 = vld [vmem:[%s1 + $0x78] sm:$0xff]
  %v91 = vld [vmem:[%s1 + $0x80] sm:$0xff]
  %v92 = vld [vmem:[%s1 + $0x88] sm:$0xff]
  %v93 = vld [vmem:[%s1 + $0x90] sm:$0xff]
  %v94 = vld [vmem:[%s1 + $0x98] sm:$0xff]
  %v95 = vld [vmem:[%s1 + $0xa0] sm:$0xff]
  %v96 = vld [vmem:[%s1 + $0xa8] sm:$0xff]
  %v97 = vld [vmem:[%s1 + $0xb0] sm:$0xff]
  %v98 = vld [vmem:[%s1 + $0xb8] sm:$0xff]
  %v99 = vld [vmem:[%s1 + $0xc0] sm:$0xff]
  %v100 = vld [vmem:[%s1 + $0xc8] sm:$0xff]
  %v101 = vld [vmem:[%s1 + $0xd0] sm:$0xff]
  %v102 = vld [vmem:[%s1 + $0xd8] sm:$0xff]
  %v103 = vld [vmem:[%s1 + $0xe0] sm:$0xff]
  %v104 = vld [vmem:[%s1 + $0xe8] sm:$0xff]
  %v105 = vld [vmem:[%s1 + $0xf0] sm:$0xff]
  %v106 = vld [vmem:[%s1 + $0xf8] sm:$0xff]
  %v107 = vld [vmem:[%s1 + $0x100] sm:$0xff]
  %v108 = vld [vmem:[%s1 + $0x108] sm:$0xff]
  %v109 = vld [vmem:[%s1 + $0x110] sm:$0xff]
  %v110 = vld [vmem:[%s1 + $0x118] sm:$0xff]
  %v111 = vld [vmem:[%s1 + $0x120] sm:$0xff]
  %v112 = vld [vmem:[%s1 + $0x128] sm:$0xff]
  %v113 = vld [vmem:[%s1 + $0x130] sm:$0xff]
  %v114 = vld [vmem:[%s1 + $0x138] sm:$0xff]
  %v115 = vld [vmem:[%s1 + $0x140] sm:$0xff]
  %v116 = vld [vmem:[%s1 + $0x148] sm:$0xff]
  %v117 = vld [vmem:[%s1 + $0x150] sm:$0xff]
  %v118 = vld [vmem:[%s1 + $0x158] sm:$0xff]
  %v119 = vld [vmem:[%s1 + $0x160] sm:$0xff]
  %v120 = vld [vmem:[%s1 + $0x168] sm:$0xff]
  %v121 = vld [vmem:[%s1 + $0x170] sm:$0xff]
  %v122 = vld [vmem:[%s1 + $0x178] sm:$0xff]
  %v123 = vld [vmem:[%s1 + $0x180] sm:$0xff]
  %v124 = vld [vmem:[%s1 + $0x188] sm:$0xff]
  %v125 = vld [vmem:[%s1 + $0x190] sm:$0xff]
  %v126 = vld [vmem:[%s1 + $0x198] sm:$0xff]
  %v127 = vld [vmem:[%s1 + $0x1a0] sm:$0xff]
  %v128 = vld [vmem:[%s1 + $0x1a8] sm:$0xff]
  %v129 = vld [vmem:[%s1 + $0x1b0] sm:$0xff]
  %v130 = vld [vmem:[%s1 + $0x1b8] sm:$0xff]
  %v131 = vld [vmem:[%s1 + $0x1c0] sm:$0xff]
  %v132 = vld [vmem:[%s1 + $0x1c8] sm:$0xff]
  %v133 = vld [vmem:[%s1 + $0x1d0] sm:$0xff]
  %v134 = vld [vmem:[%s1 + $0x1d8] sm:$0xff]
  %v135 = vld [vmem:[%s1 + $0x1e0] sm:$0xff]
  %v136 = vld [vmem:[%s1 + $0x1e8] sm:$0xff]
  %v137 = vld [vmem:[%s1 + $0x1f0] sm:$0xff]
  %v138 = vld [vmem:[%s1 + $0x1f8] sm:$0xff]
  %v139 = vadd.f32 %v11, %v75
  %v140 = vadd.f32 %v12, %v76
  %v141 = vadd.f32 %v13, %v77
  %v142 = vadd.f32 %v14, %v78
  %v143 = vadd.f32 %v15, %v79
  %v144 = vadd.f32 %v16, %v80
  %v145 = vadd.f32 %v17, %v81
  %v146 = vadd.f32 %v18, %v82
  %v147 = vadd.f32 %v19, %v83
  %v148 = vadd.f32 %v20, %v84
  %v149 = vadd.f32 %v21, %v85
  %v150 = vadd.f32 %v22, %v86
  %v151 = vadd.f32 %v23, %v87
  %v152 = vadd.f32 %v24, %v88
  %v153 = vadd.f32 %v25, %v89
  %v154 = vadd.f32 %v26, %v90
  %v155 = vadd.f32 %v27, %v91
  %v156 = vadd.f32 %v28, %v92
  %v157 = vadd.f32 %v29, %v93
  %v158 = vadd.f32 %v30, %v94
  %v159 = vadd.f32 %v31, %v95
  %v160 = vadd.f32 %v32, %v96
  %v161 = vadd.f32 %v33, %v97
  %v162 = vadd.f32 %v34, %v98
  %v163 = vadd.f32 %v35, %v99
  %v164 = vadd.f32 %v36, %v100
  %v165 = vadd.f32 %v37, %v101
  %v166 = vadd.f32 %v38, %v102
  %v167 = vadd.f32 %v39, %v103
  %v168 = vadd.f32 %v40, %v104
  %v169 = vadd.f32 %v41, %v105
  %v170 = vadd.f32 %v42, %v106
  %v171 = vadd.f32 %v43, %v107
  %v172 = vadd.f32 %v44, %v108
  %v173 = vadd.f32 %v45, %v109
  %v174 = vadd.f32 %v46, %v110
  %v175 = vadd.f32 %v47, %v111
  %v176 = vadd.f32 %v48, %v112
  %v177 = vadd.f32 %v49, %v113
  %v178 = vadd.f32 %v50, %v114
  %v179 = vadd.f32 %v51, %v115
  %v180 = vadd.f32 %v52, %v116
  %v181 = vadd.f32 %v53, %v117
  %v182 = vadd.f32 %v54, %v118
  %v183 = vadd.f32 %v55, %v119
  %v184 = vadd.f32 %v56, %v120
  %v185 = vadd.f32 %v57, %v121
  %v186 = vadd.f32 %v58, %v122
  %v187 = vadd.f32 %v59, %v123
  %v188 = vadd.f32 %v60, %v124
  %v189 = vadd.f32 %v61, %v125
  %v190 = vadd.f32 %v62, %v126
  %v191 = vadd.f32 %v63, %v127
  %v192 = vadd.f32 %v64, %v128
  %v193 = vadd.f32 %v65, %v129
  %v194 = vadd.f32 %v66, %v130
  %v195 = vadd.f32 %v67, %v131
  %v196 = vadd.f32 %v68, %v132
  %v197 = vadd.f32 %v69, %v133
  %v198 = vadd.f32 %v70, %v134
  %v199 = vadd.f32 %v71, %v135
  %v200 = vadd.f32 %v72, %v136
  %v201 = vadd.f32 %v73, %v137
  %v202 = vadd.f32 %v74, %v138
  %v203 = vmax.f32 %v139, 0.0
  %v204 = vmax.f32 %v140, 0.0
  %v205 = vmax.f32 %v141, 0.0
  %v206 = vmax.f32 %v142, 0.0
  %v207 = vmax.f32 %v143, 0.0
  %v208 = vmax.f32 %v144, 0.0
  %v209 = vmax.f32 %v145, 0.0
  %v210 = vmax.f32 %v146, 0.0
  %v211 = vmax.f32 %v147, 0.0
  %v212 = vmax.f32 %v148, 0.0
  %v213 = vmax.f32 %v149, 0.0
  %v214 = vmax.f32 %v150, 0.0
  %v215 = vmax.f32 %v151, 0.0
  %v216 = vmax.f32 %v152, 0.0
  %v217 = vmax.f32 %v153, 0.0
  %v218 = vmax.f32 %v154, 0.0
  %v219 = vmax.f32 %v155, 0.0
  %v220 = vmax.f32 %v156, 0.0
  %v221 = vmax.f32 %v157, 0.0
  %v222 = vmax.f32 %v158, 0.0
  %v223 = vmax.f32 %v159, 0.0
  %v224 = vmax.f32 %v160, 0.0
  %v225 = vmax.f32 %v161, 0.0
  %v226 = vmax.f32 %v162, 0.0
  %v227 = vmax.f32 %v163, 0.0
  %v228 = vmax.f32 %v164, 0.0
  %v229 = vmax.f32 %v165, 0.0
  %v230 = vmax.f32 %v166, 0.0
  %v231 = vmax.f32 %v167, 0.0
  %v232 = vmax.f32 %v168, 0.0
  %v233 = vmax.f32 %v169, 0.0
  %v234 = vmax.f32 %v170, 0.0
  %v235 = vmax.f32 %v171, 0.0
  %v236 = vmax.f32 %v172, 0.0
  %v237 = vmax.f32 %v173, 0.0
  %v238 = vmax.f32 %v174, 0.0
  %v239 = vmax.f32 %v175, 0.0
  %v240 = vmax.f32 %v176, 0.0
  %v241 = vmax.f32 %v177, 0.0
  %v242 = vmax.f32 %v178, 0.0
  %v243 = vmax.f32 %v179, 0.0
  %v244 = vmax.f32 %v180, 0.0
  %v245 = vmax.f32 %v181, 0.0
  %v246 = vmax.f32 %v182, 0.0
  %v247 = vmax.f32 %v183, 0.0
  %v248 = vmax.f32 %v184, 0.0
  %v249 = vmax.f32 %v185, 0.0
  %v250 = vmax.f32 %v186, 0.0
  %v251 = vmax.f32 %v187, 0.0
  %v252 = vmax.f32 %v188, 0.0
  %v253 = vmax.f32 %v189, 0.0
  %v254 = vmax.f32 %v190, 0.0
  %v255 = vmax.f32 %v191, 0.0
  %v256 = vmax.f32 %v192, 0.0
  %v257 = vmax.f32 %v193, 0.0
  %v258 = vmax.f32 %v194, 0.0
  %v259 = vmax.f32 %v195, 0.0
  %v260 = vmax.f32 %v196, 0.0
  %v261 = vmax.f32 %v197, 0.0
  %v262 = vmax.f32 %v198, 0.0
  %v263 = vmax.f32 %v199, 0.0
  %v264 = vmax.f32 %v200, 0.0
  %v265 = vmax.f32 %v201, 0.0
  %v266 = vmax.f32 %v202, 0.0
  %v267 = vmin.f32 %v203, 1.0
  %v268 = vmin.f32 %v204, 1.0
  %v269 = vmin.f32 %v205, 1.0
  %v270 = vmin.f32 %v206, 1.0
  %v271 = vmin.f32 %v207, 1.0
  %v272 = vmin.f32 %v208, 1.0
  %v273 = vmin.f32 %v209, 1.0
  %v274 = vmin.f32 %v210, 1.0
  %v275 = vmin.f32 %v211, 1.0
  %v276 = vmin.f32 %v212, 1.0
  %v277 = vmin.f32 %v213, 1.0
  %v278 = vmin.f32 %v214, 1.0
  %v279 = vmin.f32 %v215, 1.0
  %v280 = vmin.f32 %v216, 1.0
  %v281 = vmin.f32 %v217, 1.0
  %v282 = vmin.f32 %v218, 1.0
  %v283 = vmin.f32 %v219, 1.0
  %v284 = vmin.f32 %v220, 1.0
  %v285 = vmin.f32 %v221, 1.0
  %v286 = vmin.f32 %v222, 1.0
  %v287 = vmin.f32 %v223, 1.0
  %v288 = vmin.f32 %v224, 1.0
  %v289 = vmin.f32 %v225, 1.0
  %v290 = vmin.f32 %v226, 1.0
  %v291 = vmin.f32 %v227, 1.0
  %v292 = vmin.f32 %v228, 1.0
  %v293 = vmin.f32 %v229, 1.0
  %v294 = vmin.f32 %v230, 1.0
  %v295 = vmin.f32 %v231, 1.0
  %v296 = vmin.f32 %v232, 1.0
  %v297 = vmin.f32 %v233, 1.0
  %v298 = vmin.f32 %v234, 1.0
  %v299 = vmin.f32 %v235, 1.0
  %v300 = vmin.f32 %v236, 1.0
  %v301 = vmin.f32 %v237, 1.0
  %v302 = vmin.f32 %v238, 1.0
  %v303 = vmin.f32 %v239, 1.0
  %v304 = vmin.f32 %v240, 1.0
  %v305 = vmin.f32 %v241, 1.0
  %v306 = vmin.f32 %v242, 1.0
  %v307 = vmin.f32 %v243, 1.0
  %v308 = vmin.f32 %v244, 1.0
  %v309 = vmin.f32 %v245, 1.0
  %v310 = vmin.f32 %v246, 1.0
  %v311 = vmin.f32 %v247, 1.0
  %v312 = vmin.f32 %v248, 1.0
  %v313 = vmin.f32 %v249, 1.0
  %v314 = vmin.f32 %v250, 1.0
  %v315 = vmin.f32 %v251, 1.0
  %v316 = vmin.f32 %v252, 1.0
  %v317 = vmin.f32 %v253, 1.0
  %v318 = vmin.f32 %v254, 1.0
  %v319 = vmin.f32 %v255, 1.0
  %v320 = vmin.f32 %v256, 1.0
  %v321 = vmin.f32 %v257, 1.0
  %v322 = vmin.f32 %v258, 1.0
  %v323 = vmin.f32 %v259, 1.0
  %v324 = vmin.f32 %v260, 1.0
  %v325 = vmin.f32 %v261, 1.0
  %v326 = vmin.f32 %v262, 1.0
  %v327 = vmin.f32 %v263, 1.0
  %v328 = vmin.f32 %v264, 1.0
  %v329 = vmin.f32 %v265, 1.0
  %v330 = vmin.f32 %v266, 1.0
  %331 = vst [vmem:[%s2] sm:$0xff] %v267
  %vm332 = vcmask 261120
  %333 = vst.msk [vmem:[%s2 + $0x8] sm:$0xff] %vm332, %v268
  %334 = vst [vmem:[%s2 + $0x10] sm:$0xff] %v269
  %335 = vst.msk [vmem:[%s2 + $0x18] sm:$0xff] %vm332, %v270
  %336 = vst [vmem:[%s2 + $0x20] sm:$0xff] %v271
  %337 = vst.msk [vmem:[%s2 + $0x28] sm:$0xff] %vm332, %v272
  %338 = vst [vmem:[%s2 + $0x30] sm:$0xff] %v273
  %339 = vst.msk [vmem:[%s2 + $0x38] sm:$0xff] %vm332, %v274
  %340 = vst [vmem:[%s2 + $0x40] sm:$0xff] %v275
  %341 = vst.msk [vmem:[%s2 + $0x48] sm:$0xff] %vm332, %v276
  %342 = vst [vmem:[%s2 + $0x50] sm:$0xff] %v277
  %343 = vst.msk [vmem:[%s2 + $0x58] sm:$0xff] %vm332, %v278
  %344 = vst [vmem:[%s2 + $0x60] sm:$0xff] %v279
  %345 = vst.msk [vmem:[%s2 + $0x68] sm:$0xff] %vm332, %v280
  %346 = vst [vmem:[%s2 + $0x70] sm:$0xff] %v281
  %347 = vst.msk [vmem:[%s2 + $0x78] sm:$0xff] %vm332, %v282
  %348 = vst [vmem:[%s2 + $0x80] sm:$0xff] %v283
  %349 = vst.msk [vmem:[%s2 + $0x88] sm:$0xff] %vm332, %v284
  %350 = vst [vmem:[%s2 + $0x90] sm:$0xff] %v285
  %351 = vst.msk [vmem:[%s2 + $0x98] sm:$0xff] %vm332, %v286
  %352 = vst [vmem:[%s2 + $0xa0] sm:$0xff] %v287
  %353 = vst.msk [vmem:[%s2 + $0xa8] sm:$0xff] %vm332, %v288
  %354 = vst [vmem:[%s2 + $0xb0] sm:$0xff] %v289
  %355 = vst.msk [vmem:[%s2 + $0xb8] sm:$0xff] %vm332, %v290
  %356 = vst [vmem:[%s2 + $0xc0] sm:$0xff] %v291
  %357 = vst.msk [vmem:[%s2 + $0xc8] sm:$0xff] %vm332, %v292
  %358 = vst [vmem:[%s2 + $0xd0] sm:$0xff] %v293
  %359 = vst.msk [vmem:[%s2 + $0xd8] sm:$0xff] %vm332, %v294
  %360 = vst [vmem:[%s2 + $0xe0] sm:$0xff] %v295
  %361 = vst.msk [vmem:[%s2 + $0xe8] sm:$0xff] %vm332, %v296
  %362 = vst [vmem:[%s2 + $0xf0] sm:$0xff] %v297
  %363 = vst.msk [vmem:[%s2 + $0xf8] sm:$0xff] %vm332, %v298
  %364 = vst [vmem:[%s2 + $0x100] sm:$0xff] %v299
  %365 = vst.msk [vmem:[%s2 + $0x108] sm:$0xff] %vm332, %v300
  %366 = vst [vmem:[%s2 + $0x110] sm:$0xff] %v301
  %367 = vst.msk [vmem:[%s2 + $0x118] sm:$0xff] %vm332, %v302
  %368 = vst [vmem:[%s2 + $0x120] sm:$0xff] %v303
  %369 = vst.msk [vmem:[%s2 + $0x128] sm:$0xff] %vm332, %v304
  %370 = vst [vmem:[%s2 + $0x130] sm:$0xff] %v305
  %371 = vst.msk [vmem:[%s2 + $0x138] sm:$0xff] %vm332, %v306
  %372 = vst [vmem:[%s2 + $0x140] sm:$0xff] %v307
  %373 = vst.msk [vmem:[%s2 + $0x148] sm:$0xff] %vm332, %v308
  %374 = vst [vmem:[%s2 + $0x150] sm:$0xff] %v309
  %375 = vst.msk [vmem:[%s2 + $0x158] sm:$0xff] %vm332, %v310
  %376 = vst [vmem:[%s2 + $0x160] sm:$0xff] %v311
  %377 = vst.msk [vmem:[%s2 + $0x168] sm:$0xff] %vm332, %v312
  %378 = vst [vmem:[%s2 + $0x170] sm:$0xff] %v313
  %379 = vst.msk [vmem:[%s2 + $0x178] sm:$0xff] %vm332, %v314
  %380 = vst [vmem:[%s2 + $0x180] sm:$0xff] %v315
  %381 = vst.msk [vmem:[%s2 + $0x188] sm:$0xff] %vm332, %v316
  %382 = vst [vmem:[%s2 + $0x190] sm:$0xff] %v317
  %383 = vst.msk [vmem:[%s2 + $0x198] sm:$0xff] %vm332, %v318
  %384 = vst [vmem:[%s2 + $0x1a0] sm:$0xff] %v319
  %385 = vst.msk [vmem:[%s2 + $0x1a8] sm:$0xff] %vm332, %v320
  %386 = vst [vmem:[%s2 + $0x1b0] sm:$0xff] %v321
  %387 = vst.msk [vmem:[%s2 + $0x1b8] sm:$0xff] %vm332, %v322
  %388 = vst [vmem:[%s2 + $0x1c0] sm:$0xff] %v323
  %389 = vst.msk [vmem:[%s2 + $0x1c8] sm:$0xff] %vm332, %v324
  %390 = vst [vmem:[%s2 + $0x1d0] sm:$0xff] %v325
  %391 = vst.msk [vmem:[%s2 + $0x1d8] sm:$0xff] %vm332, %v326
  %392 = vst [vmem:[%s2 + $0x1e0] sm:$0xff] %v327
  %393 = vst.msk [vmem:[%s2 + $0x1e8] sm:$0xff] %vm332, %v328
  %394 = vst [vmem:[%s2 + $0x1f0] sm:$0xff] %v329
  %395 = vst.msk [vmem:[%s2 + $0x1f8] sm:$0xff] %vm332, %v330
  // Predicated region
  $region10: #{_perturb_clamp.1} parent=0 // pred_check
    _
  $region11: #{_perturb_clamp.1} parent=0 // pred_check_branch
    %397 = sbr.rel (0) target = $region13
  $region12: #{_perturb_clamp.1} parent=0 // pred_region
    _
  $region13: #{_perturb_clamp.1} parent=0 // pred_fallthru
    _
  // Predicated region
  $region14: #{_perturb_clamp.1} parent=0 // pred_check
    _
  $region15: #{_perturb_clamp.1} parent=0 // pred_check_branch
    %399 = sbr.rel (0) target = $region17
  $region16: #{_perturb_clamp.1} parent=0 // pred_region
    _
  $region17: #{_perturb_clamp.1} parent=0 // pred_fallthru
    _

</llo_original>
